<compile_context>
chip_gen: v7x
topology: tpu7x:2x2x1
jax: 0.10.0
libtpu: 0.0.40
codegen_flags: <defaults>
</compile_context>

<pallas_src>
import jax
import jax.numpy as jnp
from jax.experimental import pallas as pl
from jax.experimental.pallas import tpu as pltpu


# ---------------------------------------------------------------------------
# Pallas kernels (CM layout: channels on sublanes, flattened spatial on lanes)
# ---------------------------------------------------------------------------
def _stem1_2a_kernel(p1_ref, w1_ref, b1_ref, w2a_ref, b2a_ref, s1_ref, s2a_ref):
    # stem_1: (C1, K1) @ (K1, TM) -> (C1, TM); BN scale folded into w1.
    acc1 = jnp.dot(w1_ref[...], p1_ref[...], preferred_element_type=jnp.float32)
    s1 = jnp.maximum(acc1 + b1_ref[...], 0.0)
    s1_bf = s1.astype(s1_ref.dtype)
    s1_ref[...] = s1_bf
    # stem_2a (1x1 conv) fused on the resident s1 tile: no HBM round trip.
    acc2 = jnp.dot(w2a_ref[...], s1_bf, preferred_element_type=jnp.float32)
    s2a_ref[...] = jnp.maximum(acc2 + b2a_ref[...], 0.0).astype(s2a_ref.dtype)


def _stem2b_pool_stem3_kernel(p2_ref, taps_ref, w2b_ref, b2b_ref,
                              w3a_ref, w3b_ref, b3_ref, o_ref):
    # stem_2b: 3x3 s2 conv as matmul over im2col columns of s2a.
    acc2b = jnp.dot(w2b_ref[...], p2_ref[...], preferred_element_type=jnp.float32)
    s2b = jnp.maximum(acc2b + b2b_ref[...], 0.0).astype(w3a_ref.dtype)
    # stem_2p: 2x2/2 max-pool of s1, fused via its 4 stacked window taps
    # (pure VPU max; taps arrive as one (4, C1, TM) block -> one DMA).
    pooled = jnp.maximum(jnp.maximum(taps_ref[0], taps_ref[1]),
                         jnp.maximum(taps_ref[2], taps_ref[3]))
    # stem_3: 1x1 conv over concat([s2b, pooled]) with the weight split in two
    # K=C1 halves -> the concatenated tensor is never materialized.
    acc3 = jnp.dot(w3a_ref[...], s2b, preferred_element_type=jnp.float32)
    acc3 = acc3 + jnp.dot(w3b_ref[...], pooled, preferred_element_type=jnp.float32)
    o_ref[...] = jnp.maximum(acc3 + b3_ref[...], 0.0).astype(o_ref.dtype)


# ---------------------------------------------------------------------------
# Glue helpers (layout plumbing in plain JAX / XLA; hot path is in Pallas)
# ---------------------------------------------------------------------------
def _round_up(x, m):
    return (x + m - 1) // m * m


def _choose_tile(m, tm_max=1024):
    # Lane-axis tile: multiple of 128 (lane-dense), capped so the
    # double-buffered input + output tiles stay well inside scoped VMEM on all
    # generations (v7x: 64 MiB physical / 32 MiB scoped is the binding one).
    return min(tm_max, _round_up(m, 128))


def _im2col_cm(x_cnhw, k, stride, pad, ho, wo):
    # (C, N, H, W) -> (C*k*k, N*ho*wo).  K ordering (c, dy, dx) matches the
    # natural flatten of a (Cout, Cin, kH, kW) PyTorch conv weight.
    c, n, _, _ = x_cnhw.shape
    xp = jnp.pad(x_cnhw, ((0, 0), (0, 0), (pad, pad), (pad, pad)))
    taps = []
    for dy in range(k):
        for dx in range(k):
            taps.append(xp[:, :, dy:dy + stride * ho:stride,
                           dx:dx + stride * wo:stride])
    p = jnp.stack(taps, axis=1)                       # (C, k*k, N, ho, wo)
    return p.reshape(c * k * k, n * ho * wo)


# ---------------------------------------------------------------------------
# Parameters: synthetic Conv (no bias) + folded inference BatchNorm
# ---------------------------------------------------------------------------
def _fold_conv_bn(key, cin, cout, k):
    kw, kg, kb, km, kv = jax.random.split(key, 5)
    w = 0.1 * jax.random.normal(kw, (cout, cin, k, k), jnp.float32)
    gamma = 1.0 + 0.1 * jax.random.normal(kg, (cout,), jnp.float32)
    beta = 0.1 * jax.random.normal(kb, (cout,), jnp.float32)
    mean = 0.1 * jax.random.normal(km, (cout,), jnp.float32)
    var = jnp.abs(jax.random.normal(kv, (cout,), jnp.float32)) + 0.5
    eps = 1e-5
    scale = gamma / jnp.sqrt(var + eps)
    bias = beta - mean * scale
    # Fold the BN scale into the conv weight: y = conv(x, w*scale) + bias.
    w_folded = w * scale[:, None, None, None]
    kk = cin * k * k
    kp = _round_up(kk, 16)                            # clean bf16 sublane tiling
    w_mat = jnp.pad(w_folded.reshape(cout, kk), ((0, 0), (0, kp - kk)))
    return w_mat.astype(jnp.bfloat16), bias.reshape(cout, 1).astype(jnp.float32)


def init_stem_params(key, inp=1, num_init_features=32):
    k1, k2, k3, k4 = jax.random.split(key, 4)
    half = num_init_features // 2
    w1, b1 = _fold_conv_bn(k1, inp, num_init_features, 3)
    w2a, b2a = _fold_conv_bn(k2, num_init_features, half, 1)
    w2b, b2b = _fold_conv_bn(k3, half, num_init_features, 3)
    w3, b3 = _fold_conv_bn(k4, 2 * num_init_features, num_init_features, 1)
    # stem_3 consumes concat([stem_2b, stem_2p], channel); split its weight so
    # the concat can be fused away inside the kernel.
    w3a = w3[:, :num_init_features]
    w3b = w3[:, num_init_features:]
    return {"w1": w1, "b1": b1, "w2a": w2a, "b2a": b2a,
            "w2b": w2b, "b2b": b2b, "w3a": w3a, "w3b": w3b, "b3": b3}


# ---------------------------------------------------------------------------
# StemBlock forward (Pallas)
# ---------------------------------------------------------------------------
def stem_block(x_nchw, params):
    N, _, H, W = x_nchw.shape
    c1 = params["w1"].shape[0]            # num_init_features
    c2a = params["w2a"].shape[0]          # num_init_features // 2

    # ---------------- stem_1 (3x3, s2, p1)  +  stem_2a (1x1) ----------------
    H1 = (H + 2 - 3) // 2 + 1
    W1 = (W + 2 - 3) // 2 + 1
    M1 = N * H1 * W1
    tm1 = _choose_tile(M1)
    Mp1 = _round_up(M1, tm1)

    x_cm = jnp.transpose(x_nchw, (1, 0, 2, 3))                 # (Cin, N, H, W)
    p1 = _im2col_cm(x_cm, 3, 2, 1, H1, W1).astype(jnp.bfloat16)
    kw1 = params["w1"].shape[1]
    p1 = jnp.pad(p1, ((0, kw1 - p1.shape[0]), (0, Mp1 - M1)))

    s1, s2a = pl.pallas_call(
        _stem1_2a_kernel,
        out_shape=(jax.ShapeDtypeStruct((c1, Mp1), jnp.bfloat16),
                   jax.ShapeDtypeStruct((c2a, Mp1), jnp.bfloat16)),
        grid=(Mp1 // tm1,),
        in_specs=[
            pl.BlockSpec((kw1, tm1), lambda i: (0, i)),
            pl.BlockSpec(params["w1"].shape, lambda i: (0, 0)),
            pl.BlockSpec(params["b1"].shape, lambda i: (0, 0)),
            pl.BlockSpec(params["w2a"].shape, lambda i: (0, 0)),
            pl.BlockSpec(params["b2a"].shape, lambda i: (0, 0)),
        ],
        out_specs=(pl.BlockSpec((c1, tm1), lambda i: (0, i)),
                   pl.BlockSpec((c2a, tm1), lambda i: (0, i))),
        compiler_params=pltpu.CompilerParams(
            dimension_semantics=("parallel",)),
    )(p1, params["w1"], params["b1"], params["w2a"], params["b2a"])
    s1 = s1[:, :M1]
    s2a = s2a[:, :M1]

    # -------- stem_2b (3x3, s2, p1) + stem_2p (2x2 maxpool) + stem_3 --------
    H2 = (H1 + 2 - 3) // 2 + 1
    W2 = (W1 + 2 - 3) // 2 + 1
    assert H2 == H1 // 2 and W2 == W1 // 2   # concat requires matching spatial
    M2 = N * H2 * W2
    tm2 = _choose_tile(M2)
    Mp2 = _round_up(M2, tm2)

    s2a_cm = s2a.reshape(c2a, N, H1, W1)
    p2 = _im2col_cm(s2a_cm, 3, 2, 1, H2, W2)
    kw2 = params["w2b"].shape[1]
    p2 = jnp.pad(p2, ((0, kw2 - p2.shape[0]), (0, Mp2 - M2)))

    # The four non-overlapping 2x2 pool taps of s1, stacked into one array so
    # kernel 2 gets them in a single lane-dense DMA.
    s1_cm = s1.reshape(c1, N, H1, W1)
    taps = jnp.stack(
        [s1_cm[:, :, a:2 * H2:2, b:2 * W2:2].reshape(c1, M2)
         for a in range(2) for b in range(2)], axis=0)          # (4, C1, M2)
    taps = jnp.pad(taps, ((0, 0), (0, 0), (0, Mp2 - M2)))

    out_cm = pl.pallas_call(
        _stem2b_pool_stem3_kernel,
        out_shape=jax.ShapeDtypeStruct((c1, Mp2), jnp.float32),
        grid=(Mp2 // tm2,),
        in_specs=[
            pl.BlockSpec((kw2, tm2), lambda i: (0, i)),
            pl.BlockSpec((4, c1, tm2), lambda i: (0, 0, i)),
            pl.BlockSpec(params["w2b"].shape, lambda i: (0, 0)),
            pl.BlockSpec(params["b2b"].shape, lambda i: (0, 0)),
            pl.BlockSpec(params["w3a"].shape, lambda i: (0, 0)),
            pl.BlockSpec(params["w3b"].shape, lambda i: (0, 0)),
            pl.BlockSpec(params["b3"].shape, lambda i: (0, 0)),
        ],
        out_specs=pl.BlockSpec((c1, tm2), lambda i: (0, i)),
        compiler_params=pltpu.CompilerParams(
            dimension_semantics=("parallel",)),
    )(p2, taps, params["w2b"], params["b2b"],
      params["w3a"], params["w3b"], params["b3"])

    out = out_cm[:, :M2].reshape(c1, N, H2, W2)
    return jnp.transpose(out, (1, 0, 2, 3))            # back to NCHW


# ---------------------------------------------------------------------------
# Pure-JAX reference (same folded params) for a correctness sanity check
# ---------------------------------------------------------------------------
def _conv_bn_relu_ref(x, w_mat, bias, cin, k, stride, pad):
    cout = w_mat.shape[0]
    w = w_mat[:, :cin * k * k].astype(jnp.float32).reshape(cout, cin, k, k)
    y = jax.lax.conv_general_dilated(
        x, w, window_strides=(stride, stride),
        padding=[(pad, pad), (pad, pad)],
        dimension_numbers=("NCHW", "OIHW", "NCHW"))
    return jnp.maximum(y + bias.reshape(1, cout, 1, 1), 0.0)


def stem_block_ref(x, params):
    cin = x.shape[1]
    c1 = params["w1"].shape[0]
    s1 = _conv_bn_relu_ref(x, params["w1"], params["b1"], cin, 3, 2, 1)
    s2a = _conv_bn_relu_ref(s1, params["w2a"], params["b2a"], c1, 1, 1, 0)
    s2b = _conv_bn_relu_ref(s2a, params["w2b"], params["b2b"], c1 // 2, 3, 2, 1)
    pooled = jax.lax.reduce_window(s1, -jnp.inf, jax.lax.max,
                                   (1, 1, 2, 2), (1, 1, 2, 2), "VALID")
    cat = jnp.concatenate([s2b, pooled], axis=1)
    w3 = jnp.concatenate([params["w3a"], params["w3b"]], axis=1)
    return _conv_bn_relu_ref(cat, w3, params["b3"], 2 * c1, 1, 1, 0)


if __name__ == "__main__":
    key = jax.random.PRNGKey(0)
    kx, kp = jax.random.split(key)

    # img_channel = 1; small spatial size 16x16, batch 2.
    x = jax.random.normal(kx, (2, 1, 16, 16), jnp.float32)
    params = init_stem_params(kp, inp=1, num_init_features=32)

    out = jax.jit(stem_block)(x, params)
    out = jax.block_until_ready(out)

    assert out.shape == (2, 32, 4, 4), out.shape
    assert bool(jnp.all(jnp.isfinite(out)))

    # Loose tolerance: kernel matmuls run in bf16, reference runs in f32.
    ref = stem_block_ref(x, params)
    max_err = float(jnp.max(jnp.abs(out - ref)))
    assert max_err < 0.1, max_err

    print("KERNEL_OK")
</pallas_src>

<mosaic_0001>
module attributes {stable_mosaic.version = 11 : i64} {
  func.func @_stem1_2a_kernel(%arg0: i32, %arg1: memref<16x128xbf16, #tpu.memory_space<vmem>>, %arg2: memref<32x16xbf16, #tpu.memory_space<vmem>>, %arg3: memref<32x1xf32, #tpu.memory_space<vmem>>, %arg4: memref<16x32xbf16, #tpu.memory_space<vmem>>, %arg5: memref<16x1xf32, #tpu.memory_space<vmem>>, %arg6: memref<32x128xbf16, #tpu.memory_space<vmem>>, %arg7: memref<16x128xbf16, #tpu.memory_space<vmem>>) attributes {dimension_semantics = [#tpu.dimension_semantics<parallel>], iteration_bounds = array<i64: 1>, scalar_prefetch = 0 : i64, scratch_operands = 0 : i64, tpu.core_type = #tpu.core_type<tc>, window_params = [{transform_indices = @transform_0, window_bounds = array<i64: 16, 128>}, {pipeline_mode = #tpu.pipeline_mode<synchronous>, transform_indices = @transform_1, window_bounds = array<i64: 32, 16>}, {pipeline_mode = #tpu.pipeline_mode<synchronous>, transform_indices = @transform_2, window_bounds = array<i64: 32, 1>}, {pipeline_mode = #tpu.pipeline_mode<synchronous>, transform_indices = @transform_3, window_bounds = array<i64: 16, 32>}, {pipeline_mode = #tpu.pipeline_mode<synchronous>, transform_indices = @transform_4, window_bounds = array<i64: 16, 1>}, {transform_indices = @transform_5, window_bounds = array<i64: 32, 128>}, {transform_indices = @transform_6, window_bounds = array<i64: 16, 128>}]} {
    %c0 = arith.constant 0 : index
    %c0_0 = arith.constant 0 : index
    %0 = vector.load %arg2[%c0, %c0_0] : memref<32x16xbf16, #tpu.memory_space<vmem>>, vector<32x16xbf16>
    %c0_1 = arith.constant 0 : index
    %c0_2 = arith.constant 0 : index
    %1 = vector.load %arg1[%c0_1, %c0_2] : memref<16x128xbf16, #tpu.memory_space<vmem>>, vector<16x128xbf16>
    %cst = arith.constant dense<0.000000e+00> : vector<32x128xf32>
    %2 = tpu.matmul %0, %1, %cst {dimension_numbers = #tpu.dot_dimension_numbers<[1], [0], [0], [1], [0, 0, 1, 1], [], []>} : vector<32x16xbf16>, vector<16x128xbf16>, vector<32x128xf32> -> vector<32x128xf32>
    %c0_3 = arith.constant 0 : index
    %c0_4 = arith.constant 0 : index
    %3 = vector.load %arg3[%c0_3, %c0_4] : memref<32x1xf32, #tpu.memory_space<vmem>>, vector<32x1xf32>
    %4 = vector.broadcast %3 : vector<32x1xf32> to vector<32x128xf32>
    %5 = arith.addf %2, %4 : vector<32x128xf32>
    %cst_5 = arith.constant 0.000000e+00 : f32
    %6 = vector.broadcast %cst_5 : f32 to vector<32x128xf32>
    %7 = arith.maximumf %5, %6 : vector<32x128xf32>
    %8 = arith.truncf %7 : vector<32x128xf32> to vector<32x128xbf16>
    %c0_6 = arith.constant 0 : index
    %c0_7 = arith.constant 0 : index
    %9 = vector.load %arg6[%c0_6, %c0_7] : memref<32x128xbf16, #tpu.memory_space<vmem>>, vector<32x128xbf16>
    tpu.vector_store %arg6[%c0_6, %c0_7], %8 {strides = array<i32>} : memref<32x128xbf16, #tpu.memory_space<vmem>>, vector<32x128xbf16>,
    %c0_8 = arith.constant 0 : index
    %c0_9 = arith.constant 0 : index
    %10 = vector.load %arg4[%c0_8, %c0_9] : memref<16x32xbf16, #tpu.memory_space<vmem>>, vector<16x32xbf16>
    %cst_10 = arith.constant dense<0.000000e+00> : vector<16x128xf32>
    %11 = tpu.matmul %10, %8, %cst_10 {dimension_numbers = #tpu.dot_dimension_numbers<[1], [0], [0], [1], [0, 0, 1, 1], [], []>} : vector<16x32xbf16>, vector<32x128xbf16>, vector<16x128xf32> -> vector<16x128xf32>
    %c0_11 = arith.constant 0 : index
    %c0_12 = arith.constant 0 : index
    %12 = vector.load %arg5[%c0_11, %c0_12] : memref<16x1xf32, #tpu.memory_space<vmem>>, vector<16x1xf32>
    %13 = vector.broadcast %12 : vector<16x1xf32> to vector<16x128xf32>
    %14 = arith.addf %11, %13 : vector<16x128xf32>
    %cst_13 = arith.constant 0.000000e+00 : f32
    %15 = vector.broadcast %cst_13 : f32 to vector<16x128xf32>
    %16 = arith.maximumf %14, %15 : vector<16x128xf32>
    %17 = arith.truncf %16 : vector<16x128xf32> to vector<16x128xbf16>
    %c0_14 = arith.constant 0 : index
    %c0_15 = arith.constant 0 : index
    %18 = vector.load %arg7[%c0_14, %c0_15] : memref<16x128xbf16, #tpu.memory_space<vmem>>, vector<16x128xbf16>
    tpu.vector_store %arg7[%c0_14, %c0_15], %17 {strides = array<i32>} : memref<16x128xbf16, #tpu.memory_space<vmem>>, vector<16x128xbf16>,
    return
  }
  func.func @transform_0(%arg0: i32) -> (i32, i32) {
    %c0_i32 = arith.constant 0 : i32
    %c0_i32_0 = arith.constant 0 : i32
    return %c0_i32, %arg0 : i32, i32
  }
  func.func @transform_1(%arg0: i32) -> (i32, i32) {
    %c0_i32 = arith.constant 0 : i32
    %c0_i32_0 = arith.constant 0 : i32
    %c0_i32_1 = arith.constant 0 : i32
    return %c0_i32, %c0_i32_0 : i32, i32
  }
  func.func @transform_2(%arg0: i32) -> (i32, i32) {
    %c0_i32 = arith.constant 0 : i32
    %c0_i32_0 = arith.constant 0 : i32
    %c0_i32_1 = arith.constant 0 : i32
    return %c0_i32, %c0_i32_0 : i32, i32
  }
  func.func @transform_3(%arg0: i32) -> (i32, i32) {
    %c0_i32 = arith.constant 0 : i32
    %c0_i32_0 = arith.constant 0 : i32
    %c0_i32_1 = arith.constant 0 : i32
    return %c0_i32, %c0_i32_0 : i32, i32
  }
  func.func @transform_4(%arg0: i32) -> (i32, i32) {
    %c0_i32 = arith.constant 0 : i32
    %c0_i32_0 = arith.constant 0 : i32
    %c0_i32_1 = arith.constant 0 : i32
    return %c0_i32, %c0_i32_0 : i32, i32
  }
  func.func @transform_5(%arg0: i32) -> (i32, i32) {
    %c0_i32 = arith.constant 0 : i32
    %c0_i32_0 = arith.constant 0 : i32
    return %c0_i32, %arg0 : i32, i32
  }
  func.func @transform_6(%arg0: i32) -> (i32, i32) {
    %c0_i32 = arith.constant 0 : i32
    %c0_i32_0 = arith.constant 0 : i32
    return %c0_i32, %arg0 : i32, i32
  }
}

module attributes {stable_mosaic.version = 11 : i64} {
  func.func @_stem2b_pool_stem3_kernel(%arg0: i32, %arg1: memref<144x128xbf16, #tpu.memory_space<vmem>>, %arg2: memref<4x32x128xbf16, #tpu.memory_space<vmem>>, %arg3: memref<32x144xbf16, #tpu.memory_space<vmem>>, %arg4: memref<32x1xf32, #tpu.memory_space<vmem>>, %arg5: memref<32x32xbf16, #tpu.memory_space<vmem>>, %arg6: memref<32x32xbf16, #tpu.memory_space<vmem>>, %arg7: memref<32x1xf32, #tpu.memory_space<vmem>>, %arg8: memref<32x128xf32, #tpu.memory_space<vmem>>) attributes {dimension_semantics = [#tpu.dimension_semantics<parallel>], iteration_bounds = array<i64: 1>, scalar_prefetch = 0 : i64, scratch_operands = 0 : i64, tpu.core_type = #tpu.core_type<tc>, window_params = [{transform_indices = @transform_0, window_bounds = array<i64: 144, 128>}, {transform_indices = @transform_1, window_bounds = array<i64: 4, 32, 128>}, {pipeline_mode = #tpu.pipeline_mode<synchronous>, transform_indices = @transform_2, window_bounds = array<i64: 32, 144>}, {pipeline_mode = #tpu.pipeline_mode<synchronous>, transform_indices = @transform_3, window_bounds = array<i64: 32, 1>}, {pipeline_mode = #tpu.pipeline_mode<synchronous>, transform_indices = @transform_4, window_bounds = array<i64: 32, 32>}, {pipeline_mode = #tpu.pipeline_mode<synchronous>, transform_indices = @transform_5, window_bounds = array<i64: 32, 32>}, {pipeline_mode = #tpu.pipeline_mode<synchronous>, transform_indices = @transform_6, window_bounds = array<i64: 32, 1>}, {transform_indices = @transform_7, window_bounds = array<i64: 32, 128>}]} {
    %c0 = arith.constant 0 : index
    %c0_0 = arith.constant 0 : index
    %0 = vector.load %arg3[%c0, %c0_0] : memref<32x144xbf16, #tpu.memory_space<vmem>>, vector<32x144xbf16>
    %c0_1 = arith.constant 0 : index
    %c0_2 = arith.constant 0 : index
    %1 = vector.load %arg1[%c0_1, %c0_2] : memref<144x128xbf16, #tpu.memory_space<vmem>>, vector<144x128xbf16>
    %cst = arith.constant dense<0.000000e+00> : vector<32x128xf32>
    %2 = tpu.matmul %0, %1, %cst {dimension_numbers = #tpu.dot_dimension_numbers<[1], [0], [0], [1], [0, 0, 1, 1], [], []>} : vector<32x144xbf16>, vector<144x128xbf16>, vector<32x128xf32> -> vector<32x128xf32>
    %c0_3 = arith.constant 0 : index
    %c0_4 = arith.constant 0 : index
    %3 = vector.load %arg4[%c0_3, %c0_4] : memref<32x1xf32, #tpu.memory_space<vmem>>, vector<32x1xf32>
    %4 = vector.broadcast %3 : vector<32x1xf32> to vector<32x128xf32>
    %5 = arith.addf %2, %4 : vector<32x128xf32>
    %cst_5 = arith.constant 0.000000e+00 : f32
    %6 = vector.broadcast %cst_5 : f32 to vector<32x128xf32>
    %7 = arith.maximumf %5, %6 : vector<32x128xf32>
    %8 = arith.truncf %7 : vector<32x128xf32> to vector<32x128xbf16>
    %c0_6 = arith.constant 0 : index
    %c0_7 = arith.constant 0 : index
    %c0_8 = arith.constant 0 : index
    %9 = vector.load %arg2[%c0_6, %c0_7, %c0_8] : memref<4x32x128xbf16, #tpu.memory_space<vmem>>, vector<1x32x128xbf16>
    %10 = vector.shape_cast %9 : vector<1x32x128xbf16> to vector<32x128xbf16>
    %c1 = arith.constant 1 : index
    %c0_9 = arith.constant 0 : index
    %c0_10 = arith.constant 0 : index
    %11 = vector.load %arg2[%c1, %c0_9, %c0_10] : memref<4x32x128xbf16, #tpu.memory_space<vmem>>, vector<1x32x128xbf16>
    %12 = vector.shape_cast %11 : vector<1x32x128xbf16> to vector<32x128xbf16>
    %13 = arith.maximumf %10, %12 : vector<32x128xbf16>
    %c2 = arith.constant 2 : index
    %c0_11 = arith.constant 0 : index
    %c0_12 = arith.constant 0 : index
    %14 = vector.load %arg2[%c2, %c0_11, %c0_12] : memref<4x32x128xbf16, #tpu.memory_space<vmem>>, vector<1x32x128xbf16>
    %15 = vector.shape_cast %14 : vector<1x32x128xbf16> to vector<32x128xbf16>
    %c3 = arith.constant 3 : index
    %c0_13 = arith.constant 0 : index
    %c0_14 = arith.constant 0 : index
    %16 = vector.load %arg2[%c3, %c0_13, %c0_14] : memref<4x32x128xbf16, #tpu.memory_space<vmem>>, vector<1x32x128xbf16>
    %17 = vector.shape_cast %16 : vector<1x32x128xbf16> to vector<32x128xbf16>
    %18 = arith.maximumf %15, %17 : vector<32x128xbf16>
    %19 = arith.maximumf %13, %18 : vector<32x128xbf16>
    %c0_15 = arith.constant 0 : index
    %c0_16 = arith.constant 0 : index
    %20 = vector.load %arg5[%c0_15, %c0_16] : memref<32x32xbf16, #tpu.memory_space<vmem>>, vector<32x32xbf16>
    %cst_17 = arith.constant dense<0.000000e+00> : vector<32x128xf32>
    %21 = tpu.matmul %20, %8, %cst_17 {dimension_numbers = #tpu.dot_dimension_numbers<[1], [0], [0], [1], [0, 0, 1, 1], [], []>} : vector<32x32xbf16>, vector<32x128xbf16>, vector<32x128xf32> -> vector<32x128xf32>
    %c0_18 = arith.constant 0 : index
    %c0_19 = arith.constant 0 : index
    %22 = vector.load %arg6[%c0_18, %c0_19] : memref<32x32xbf16, #tpu.memory_space<vmem>>, vector<32x32xbf16>
    %cst_20 = arith.constant dense<0.000000e+00> : vector<32x128xf32>
    %23 = tpu.matmul %22, %19, %cst_20 {dimension_numbers = #tpu.dot_dimension_numbers<[1], [0], [0], [1], [0, 0, 1, 1], [], []>} : vector<32x32xbf16>, vector<32x128xbf16>, vector<32x128xf32> -> vector<32x128xf32>
    %24 = arith.addf %21, %23 : vector<32x128xf32>
    %c0_21 = arith.constant 0 : index
    %c0_22 = arith.constant 0 : index
    %25 = vector.load %arg7[%c0_21, %c0_22] : memref<32x1xf32, #tpu.memory_space<vmem>>, vector<32x1xf32>
    %26 = vector.broadcast %25 : vector<32x1xf32> to vector<32x128xf32>
    %27 = arith.addf %24, %26 : vector<32x128xf32>
    %cst_23 = arith.constant 0.000000e+00 : f32
    %28 = vector.broadcast %cst_23 : f32 to vector<32x128xf32>
    %29 = arith.maximumf %27, %28 : vector<32x128xf32>
    %c0_24 = arith.constant 0 : index
    %c0_25 = arith.constant 0 : index
    %30 = vector.load %arg8[%c0_24, %c0_25] : memref<32x128xf32, #tpu.memory_space<vmem>>, vector<32x128xf32>
    tpu.vector_store %arg8[%c0_24, %c0_25], %29 {strides = array<i32>} : memref<32x128xf32, #tpu.memory_space<vmem>>, vector<32x128xf32>,
    return
  }
  func.func @transform_0(%arg0: i32) -> (i32, i32) {
    %c0_i32 = arith.constant 0 : i32
    %c0_i32_0 = arith.constant 0 : i32
    return %c0_i32, %arg0 : i32, i32
  }
  func.func @transform_1(%arg0: i32) -> (i32, i32, i32) {
    %c0_i32 = arith.constant 0 : i32
    %c0_i32_0 = arith.constant 0 : i32
    %c0_i32_1 = arith.constant 0 : i32
    return %c0_i32, %c0_i32_0, %arg0 : i32, i32, i32
  }
  func.func @transform_2(%arg0: i32) -> (i32, i32) {
    %c0_i32 = arith.constant 0 : i32
    %c0_i32_0 = arith.constant 0 : i32
    %c0_i32_1 = arith.constant 0 : i32
    return %c0_i32, %c0_i32_0 : i32, i32
  }
  func.func @transform_3(%arg0: i32) -> (i32, i32) {
    %c0_i32 = arith.constant 0 : i32
    %c0_i32_0 = arith.constant 0 : i32
    %c0_i32_1 = arith.constant 0 : i32
    return %c0_i32, %c0_i32_0 : i32, i32
  }
  func.func @transform_4(%arg0: i32) -> (i32, i32) {
    %c0_i32 = arith.constant 0 : i32
    %c0_i32_0 = arith.constant 0 : i32
    %c0_i32_1 = arith.constant 0 : i32
    return %c0_i32, %c0_i32_0 : i32, i32
  }
  func.func @transform_5(%arg0: i32) -> (i32, i32) {
    %c0_i32 = arith.constant 0 : i32
    %c0_i32_0 = arith.constant 0 : i32
    %c0_i32_1 = arith.constant 0 : i32
    return %c0_i32, %c0_i32_0 : i32, i32
  }
  func.func @transform_6(%arg0: i32) -> (i32, i32) {
    %c0_i32 = arith.constant 0 : i32
    %c0_i32_0 = arith.constant 0 : i32
    %c0_i32_1 = arith.constant 0 : i32
    return %c0_i32, %c0_i32_0 : i32, i32
  }
  func.func @transform_7(%arg0: i32) -> (i32, i32) {
    %c0_i32 = arith.constant 0 : i32
    %c0_i32_0 = arith.constant 0 : i32
    return %c0_i32, %arg0 : i32, i32
  }
}

</mosaic_0001>

<llo_original>
// kernel: stem_block.2
$region0: #{stem_block.2}
  #allocation0 [shape = 'u32[]', space=smem, size = 0x4, offset = 0x4, fixed_abs, tag = 'smem constant byte address 0x4 - core index']
  #allocation1 [shape = 'u32[144,128]{1,0:T(1,128)}', space=vmem, size = 0x12000, scoped, tag = 'internal scratch']
  %s0 = inlined_call_operand.vmem [shape: bf16[16,128], index: 0, kind: input, shape index: {}]
  %s1 = inlined_call_operand.vmem [shape: bf16[32,16], index: 1, kind: input, shape index: {}]
  %s2 = inlined_call_operand.vmem [shape: f32[32,1], index: 2, kind: input, shape index: {}]
  %s3 = inlined_call_operand.vmem [shape: bf16[16,32], index: 3, kind: input, shape index: {}]
  %s4 = inlined_call_operand.vmem [shape: f32[16,1], index: 4, kind: input, shape index: {}]
  %s5 = inlined_call_operand.vmem [shape: bf16[32,128], index: 5, kind: output, shape index: {0}]
  %s6 = inlined_call_operand.vmem [shape: bf16[16,128], index: 6, kind: output, shape index: {1}]
  %7 = xla_tuple %s5, %s6
  %s8 = sld [smem:[#allocation0]]
  $region38: #{stem_block.2} parent=0
    _
  %s10 = ssub.s32 1, %s8
  %s11 = scalar_select 0, %s10, %s8
  // Predicated region
  $region2: #{stem_block.2} parent=0 // pred_check
    _
  $region3: #{stem_block.2} parent=0 // pred_check_branch
    %13 = sbr.rel (0) target = $region5
  $region4: #{stem_block.2} parent=0 // pred_region
    _
  $region5: #{stem_block.2} parent=0 // pred_fallthru
    _
  // Predicated region
  $region6: #{stem_block.2} parent=0 // pred_check
    _
  $region7: #{stem_block.2} parent=0 // pred_check_branch
    %15 = sbr.rel (0) target = $region9
  $region8: #{stem_block.2} parent=0 // pred_region
    _
  $region9: #{stem_block.2} parent=0 // pred_fallthru
    _
  // Predicated region
  $region10: #{stem_block.2} parent=0 // pred_check
    _
  $region11: #{stem_block.2} parent=0 // pred_check_branch
    %17 = sbr.rel (0) target = $region13
  $region12: #{stem_block.2} parent=0 // pred_region
    _
  $region13: #{stem_block.2} parent=0 // pred_fallthru
    _
  // Predicated region
  $region14: #{stem_block.2} parent=0 // pred_check
    _
  $region15: #{stem_block.2} parent=0 // pred_check_branch
    %19 = sbr.rel (0) target = $region17
  $region16: #{stem_block.2} parent=0 // pred_region
    _
  $region17: #{stem_block.2} parent=0 // pred_fallthru
    _
  // Predicated region
  $region18: #{stem_block.2} parent=0 // pred_check
    _
  $region19: #{stem_block.2} parent=0 // pred_check_branch
    %21 = sbr.rel (0) target = $region21
  $region20: #{stem_block.2} parent=0 // pred_region
    _
  $region21: #{stem_block.2} parent=0 // pred_fallthru
    _
  %v23 = vld [vmem:[%s1] sm:$0xf]
  %v24 = vld [vmem:[%s1 + $0x4] sm:$0xf]
  %v25 = vld [vmem:[%s1 + $0x8] sm:$0xf]
  %v26 = vld [vmem:[%s1 + $0xc] sm:$0xf]
  %v27 = vld [vmem:[%s0] sm:$0xf]
  %v28 = vld [vmem:[%s0 + $0x4] sm:$0xf]
  %v29 = vld [vmem:[%s2] sm:$0xff]
  %v30 = vld [vmem:[%s2 + $0x8] sm:$0xff]
  %v31 = vld [vmem:[%s2 + $0x10] sm:$0xff]
  %v32 = vld [vmem:[%s2 + $0x18] sm:$0xff]
  %34 = vset.pattern.permute.xlu0 0
  %35 = vperm.xlu0 %34, %v29
  %v36 = vpop.permute.xlu0 %35
  %39 = vset.pattern.permute.xlu0 0
  %40 = vperm.xlu0 %39, %v30
  %v41 = vpop.permute.xlu0 %40
  %44 = vset.pattern.permute.xlu0 0
  %45 = vperm.xlu0 %44, %v31
  %v46 = vpop.permute.xlu0 %45
  %49 = vset.pattern.permute.xlu0 0
  %50 = vperm.xlu0 %49, %v32
  %v51 = vpop.permute.xlu0 %50
  %v57 = vunpack.c.l.b16 %v23
  %v58 = vunpack.c.l.b16 %v24
  %v59 = vunpack.c.l.b16 %v25
  %v60 = vunpack.c.l.b16 %v26
  %v61 = vpack.c.b16 %v58, %v57
  %v62 = vpack.c.b16 %v60, %v59
  %v65 = vunpack.c.l.b16 %v27
  %v66 = vunpack.c.l.b16 %v28
  %v67 = vpack.c.b16 %v66, %v65
  %vm69 = vcmask 130048
  %v71 = vsel %vm69, %v61, 0
  %v74 = vsel %vm69, %v62, 0
  %76 = vmatprep.subr.bf16.mxu0 0
  %77 = vmatpush1.bf16.msra.mxu0 %v67
  %78 = vmatprep.subr.bf16.mxu0 0
  %79 = vmatpush1.bf16.msra.mxu0 0
  %80 = vmatprep.subr.bf16.mxu0 0
  %81 = vmatpush1.bf16.msra.mxu0 0
  %82 = vmatprep.subr.bf16.mxu0 0
  %83 = vmatpush1.bf16.msra.mxu0 0
  %84 = vmatprep.subr.bf16.mxu0 0
  %85 = vmatpush1.bf16.msra.mxu0 0
  %86 = vmatprep.subr.bf16.mxu0 0
  %87 = vmatpush1.bf16.msra.mxu0 0
  %88 = vmatprep.subr.bf16.mxu0 0
  %89 = vmatpush1.bf16.msra.mxu0 0
  %90 = vmatprep.subr.bf16.mxu0 0
  %91 = vmatpush1.bf16.msra.mxu0 0
  %92 = vmatprep.subr.bf16.mxu0 0
  %93 = vmatpush1.bf16.msra.mxu0 0
  %94 = vmatprep.subr.bf16.mxu0 0
  %95 = vmatpush1.bf16.msra.mxu0 0
  %96 = vmatprep.subr.bf16.mxu0 0
  %97 = vmatpush1.bf16.msra.mxu0 0
  %98 = vmatprep.subr.bf16.mxu0 0
  %99 = vmatpush1.bf16.msra.mxu0 0
  %100 = vmatprep.subr.bf16.mxu0 0
  %101 = vmatpush1.bf16.msra.mxu0 0
  %102 = vmatprep.subr.bf16.mxu0 0
  %103 = vmatpush1.bf16.msra.mxu0 0
  %104 = vmatprep.subr.bf16.mxu0 0
  %105 = vmatpush1.bf16.msra.mxu0 0
  %106 = vmatprep.subr.bf16.mxu0 0
  %107 = vmatpush1.bf16.msra.mxu0 0
  %108 = vmatprep.mubr.bf16.mxu0 0
  %109 = vmatmul.mubr.bf16.gmra.mrb[0].mxu0 %v71
  %v110 = vpop.f32.mrb[0].mxu0
  %v111 = vadd.f32 %v36, %v110
  %v112 = vpop.f32.mrb[0].mxu0
  %v113 = vpop.f32.mrb[0].mxu0
  %v114 = vadd.f32 %v41, %v113
  %v115 = vpop.f32.mrb[0].mxu0
  %116 = vmatprep.mubr.bf16.mxu0 0
  %117 = vmatmul.mubr.bf16.gmra.mrb[0].mxu0 %v74
  %v118 = vpop.f32.mrb[0].mxu0
  %v119 = vadd.f32 %v46, %v118
  %v120 = vpop.f32.mrb[0].mxu0
  %v121 = vpop.f32.mrb[0].mxu0
  %v122 = vadd.f32 %v51, %v121
  %v123 = vpop.f32.mrb[0].mxu0
  %124 = vdwg.mxu0
  %v125 = vmax.f32 %v111, 0.0
  %v126 = vmax.f32 %v114, 0.0
  %v127 = vmax.f32 %v119, 0.0
  %v128 = vmax.f32 %v122, 0.0
  %v129 = vpack.c.bf16 %v126, %v125
  %v130 = vpack.c.bf16 %v128, %v127
  %v133 = vunpack.c.l.b16 %v129
  %v134 = vunpack.c.h.b16 %v129
  %v135 = vunpack.c.l.b16 %v130
  %v136 = vunpack.c.h.b16 %v130
  %v137 = vpack.c.b16 %v133, %v133
  %v138 = vpack.c.b16 %v134, %v134
  %v139 = vpack.c.b16 %v135, %v135
  %v140 = vpack.c.b16 %v136, %v136
  %145 = vst [vmem:[%s5] sm:$0xf] %v137
  %146 = vst [vmem:[%s5 + $0x4] sm:$0xf] %v138
  %147 = vst [vmem:[%s5 + $0x8] sm:$0xf] %v139
  %148 = vst [vmem:[%s5 + $0xc] sm:$0xf] %v140
  %v149 = vld [vmem:[%s3] sm:$0xf]
  %v150 = vld [vmem:[%s3 + $0x4] sm:$0xf]
  %v151 = vld [vmem:[%s4] sm:$0xff]
  %v152 = vld [vmem:[%s4 + $0x8] sm:$0xff]
  %154 = vset.pattern.permute.xlu0 0
  %155 = vperm.xlu0 %154, %v151
  %v156 = vpop.permute.xlu0 %155
  %159 = vset.pattern.permute.xlu0 0
  %160 = vperm.xlu0 %159, %v152
  %v161 = vpop.permute.xlu0 %160
  %v165 = vunpack.c.l.b16 %v149
  %v166 = vunpack.c.l.b16 %v150
  %v167 = vpack.c.b16 %v166, %v165
  %vm168 = vcmask 261120
  %v170 = vsel %vm168, %v167, 0
  %172 = vmatprep.subr.bf16.mxu0 0
  %173 = vmatpush1.bf16.msra.mxu0 %v129
  %174 = vmatprep.subr.bf16.mxu0 0
  %175 = vmatpush1.bf16.msra.mxu0 %v130
  %176 = vmatprep.subr.bf16.mxu0 0
  %177 = vmatpush1.bf16.msra.mxu0 0
  %178 = vmatprep.subr.bf16.mxu0 0
  %179 = vmatpush1.bf16.msra.mxu0 0
  %180 = vmatprep.subr.bf16.mxu0 0
  %181 = vmatpush1.bf16.msra.mxu0 0
  %182 = vmatprep.subr.bf16.mxu0 0
  %183 = vmatpush1.bf16.msra.mxu0 0
  %184 = vmatprep.subr.bf16.mxu0 0
  %185 = vmatpush1.bf16.msra.mxu0 0
  %186 = vmatprep.subr.bf16.mxu0 0
  %187 = vmatpush1.bf16.msra.mxu0 0
  %188 = vmatprep.subr.bf16.mxu0 0
  %189 = vmatpush1.bf16.msra.mxu0 0
  %190 = vmatprep.subr.bf16.mxu0 0
  %191 = vmatpush1.bf16.msra.mxu0 0
  %192 = vmatprep.subr.bf16.mxu0 0
  %193 = vmatpush1.bf16.msra.mxu0 0
  %194 = vmatprep.subr.bf16.mxu0 0
  %195 = vmatpush1.bf16.msra.mxu0 0
  %196 = vmatprep.subr.bf16.mxu0 0
  %197 = vmatpush1.bf16.msra.mxu0 0
  %198 = vmatprep.subr.bf16.mxu0 0
  %199 = vmatpush1.bf16.msra.mxu0 0
  %200 = vmatprep.subr.bf16.mxu0 0
  %201 = vmatpush1.bf16.msra.mxu0 0
  %202 = vmatprep.subr.bf16.mxu0 0
  %203 = vmatpush1.bf16.msra.mxu0 0
  %204 = vmatprep.mubr.bf16.mxu0 0
  %205 = vmatmul.mubr.bf16.gmra.mrb[0].mxu0 %v170
  %v206 = vpop.f32.mrb[0].mxu0
  %v207 = vadd.f32 %v156, %v206
  %v208 = vpop.f32.mrb[0].mxu0
  %v209 = vpop.f32.mrb[0].mxu0
  %v210 = vadd.f32 %v161, %v209
  %v211 = vpop.f32.mrb[0].mxu0
  %212 = vdwg.mxu0
  %v213 = vmax.f32 %v207, 0.0
  %v214 = vmax.f32 %v210, 0.0
  %v215 = vpack.c.bf16 %v214, %v213
  %v217 = vunpack.c.l.b16 %v215
  %v218 = vunpack.c.h.b16 %v215
  %v219 = vpack.c.b16 %v217, %v217
  %v220 = vpack.c.b16 %v218, %v218
  %223 = vst [vmem:[%s6] sm:$0xf] %v219
  %224 = vst [vmem:[%s6 + $0x4] sm:$0xf] %v220
  // Predicated region
  $region22: #{stem_block.2} parent=0 // pred_check
    _
  $region23: #{stem_block.2} parent=0 // pred_check_branch
    %226 = sbr.rel (0) target = $region25
  $region24: #{stem_block.2} parent=0 // pred_region
    _
  $region25: #{stem_block.2} parent=0 // pred_fallthru
    _
  // Predicated region
  $region26: #{stem_block.2} parent=0 // pred_check
    _
  $region27: #{stem_block.2} parent=0 // pred_check_branch
    %228 = sbr.rel (0) target = $region29
  $region28: #{stem_block.2} parent=0 // pred_region
    _
  $region29: #{stem_block.2} parent=0 // pred_fallthru
    _
  // Predicated region
  $region30: #{stem_block.2} parent=0 // pred_check
    _
  $region31: #{stem_block.2} parent=0 // pred_check_branch
    %230 = sbr.rel (0) target = $region33
  $region32: #{stem_block.2} parent=0 // pred_region
    _
  $region33: #{stem_block.2} parent=0 // pred_fallthru
    _
  // Predicated region
  $region34: #{stem_block.2} parent=0 // pred_check
    _
  $region35: #{stem_block.2} parent=0 // pred_check_branch
    %232 = sbr.rel (0) target = $region37
  $region36: #{stem_block.2} parent=0 // pred_region
    _
  $region37: #{stem_block.2} parent=0 // pred_fallthru
    _

// kernel: stem_block.3
$region0: #{stem_block.3}
  #allocation0 [shape = 'u32[]', space=smem, size = 0x4, offset = 0x4, fixed_abs, tag = 'smem constant byte address 0x4 - core index']
  #allocation1 [shape = 'u32[144,128]{1,0:T(1,128)}', space=vmem, size = 0x12000, scoped, tag = 'internal scratch']
  %s0 = inlined_call_operand.vmem [shape: bf16[144,128], index: 0, kind: input, shape index: {}]
  %s1 = inlined_call_operand.vmem [shape: bf16[4,32,128], index: 1, kind: input, shape index: {}]
  %s2 = inlined_call_operand.vmem [shape: bf16[32,144], index: 2, kind: input, shape index: {}]
  %s3 = inlined_call_operand.vmem [shape: f32[32,1], index: 3, kind: input, shape index: {}]
  %s4 = inlined_call_operand.vmem [shape: bf16[32,32], index: 4, kind: input, shape index: {}]
  %s5 = inlined_call_operand.vmem [shape: bf16[32,32], index: 5, kind: input, shape index: {}]
  %s6 = inlined_call_operand.vmem [shape: f32[32,1], index: 6, kind: input, shape index: {}]
  %s7 = inlined_call_operand.vmem [shape: f32[32,128], index: 7, kind: output, shape index: {}]
  %s8 = sld [smem:[#allocation0]]
  $region38: #{stem_block.3} parent=0
    _
  %s10 = ssub.s32 1, %s8
  %s11 = scalar_select 0, %s10, %s8
  // Predicated region
  $region2: #{stem_block.3} parent=0 // pred_check
    _
  $region3: #{stem_block.3} parent=0 // pred_check_branch
    %13 = sbr.rel (0) target = $region5
  $region4: #{stem_block.3} parent=0 // pred_region
    _
  $region5: #{stem_block.3} parent=0 // pred_fallthru
    _
  // Predicated region
  $region6: #{stem_block.3} parent=0 // pred_check
    _
  $region7: #{stem_block.3} parent=0 // pred_check_branch
    %15 = sbr.rel (0) target = $region9
  $region8: #{stem_block.3} parent=0 // pred_region
    _
  $region9: #{stem_block.3} parent=0 // pred_fallthru
    _
  // Predicated region
  $region10: #{stem_block.3} parent=0 // pred_check
    _
  $region11: #{stem_block.3} parent=0 // pred_check_branch
    %17 = sbr.rel (0) target = $region13
  $region12: #{stem_block.3} parent=0 // pred_region
    _
  $region13: #{stem_block.3} parent=0 // pred_fallthru
    _
  // Predicated region
  $region14: #{stem_block.3} parent=0 // pred_check
    _
  $region15: #{stem_block.3} parent=0 // pred_check_branch
    %19 = sbr.rel (0) target = $region17
  $region16: #{stem_block.3} parent=0 // pred_region
    _
  $region17: #{stem_block.3} parent=0 // pred_fallthru
    _
  // Predicated region
  $region18: #{stem_block.3} parent=0 // pred_check
    _
  $region19: #{stem_block.3} parent=0 // pred_check_branch
    %21 = sbr.rel (0) target = $region21
  $region20: #{stem_block.3} parent=0 // pred_region
    _
  $region21: #{stem_block.3} parent=0 // pred_fallthru
    _
  // Predicated region
  $region22: #{stem_block.3} parent=0 // pred_check
    _
  $region23: #{stem_block.3} parent=0 // pred_check_branch
    %23 = sbr.rel (0) target = $region25
  $region24: #{stem_block.3} parent=0 // pred_region
    _
  $region25: #{stem_block.3} parent=0 // pred_fallthru
    _
  // Predicated region
  $region26: #{stem_block.3} parent=0 // pred_check
    _
  $region27: #{stem_block.3} parent=0 // pred_check_branch
    %25 = sbr.rel (0) target = $region29
  $region28: #{stem_block.3} parent=0 // pred_region
    _
  $region29: #{stem_block.3} parent=0 // pred_fallthru
    _
  %v27 = vld [vmem:[%s2] sm:$0xff]
  %v28 = vld [vmem:[%s2 + $0x8] sm:$0xff]
  %v29 = vld [vmem:[%s2 + $0x10] sm:$0xff]
  %v30 = vld [vmem:[%s2 + $0x18] sm:$0xff]
  %v31 = vld [vmem:[%s0] sm:$0xf]
  %v32 = vld [vmem:[%s0 + $0x4] sm:$0xf]
  %v33 = vld [vmem:[%s0 + $0x8] sm:$0xf]
  %v34 = vld [vmem:[%s0 + $0xc] sm:$0xf]
  %v35 = vld [vmem:[%s0 + $0x10] sm:$0xf]
  %v36 = vld [vmem:[%s0 + $0x14] sm:$0xf]
  %v37 = vld [vmem:[%s0 + $0x18] sm:$0xf]
  %v38 = vld [vmem:[%s0 + $0x1c] sm:$0xf]
  %v39 = vld [vmem:[%s0 + $0x20] sm:$0xf]
  %v40 = vld [vmem:[%s0 + $0x24] sm:$0xf]
  %v41 = vld [vmem:[%s0 + $0x28] sm:$0xf]
  %v42 = vld [vmem:[%s0 + $0x2c] sm:$0xf]
  %v43 = vld [vmem:[%s0 + $0x30] sm:$0xf]
  %v44 = vld [vmem:[%s0 + $0x34] sm:$0xf]
  %v45 = vld [vmem:[%s0 + $0x38] sm:$0xf]
  %v46 = vld [vmem:[%s0 + $0x3c] sm:$0xf]
  %v47 = vld [vmem:[%s0 + $0x40] sm:$0xf]
  %v48 = vld [vmem:[%s0 + $0x44] sm:$0xf]
  %v49 = vld [vmem:[%s3] sm:$0xff]
  %v50 = vld [vmem:[%s3 + $0x8] sm:$0xff]
  %v51 = vld [vmem:[%s3 + $0x10] sm:$0xff]
  %v52 = vld [vmem:[%s3 + $0x18] sm:$0xff]
  %54 = vset.pattern.permute.xlu0 0
  %55 = vperm.xlu0 %54, %v49
  %v56 = vpop.permute.xlu0 %55
  %59 = vset.pattern.permute.xlu0 0
  %60 = vperm.xlu0 %59, %v50
  %v61 = vpop.permute.xlu0 %60
  %64 = vset.pattern.permute.xlu0 0
  %65 = vperm.xlu0 %64, %v51
  %v66 = vpop.permute.xlu0 %65
  %69 = vset.pattern.permute.xlu0 0
  %70 = vperm.xlu0 %69, %v52
  %v71 = vpop.permute.xlu0 %70
  %v77 = vunpack.c.l.b16 %v27
  %v78 = vunpack.c.h.b16 %v27
  %v79 = vunpack.c.l.b16 %v28
  %v80 = vunpack.c.h.b16 %v28
  %v81 = vunpack.c.l.b16 %v29
  %v82 = vunpack.c.h.b16 %v29
  %v83 = vunpack.c.l.b16 %v30
  %v84 = vunpack.c.h.b16 %v30
  %v85 = vpack.c.b16 %v79, %v77
  %v86 = vpack.c.b16 %v80, %v78
  %v87 = vpack.c.b16 %v83, %v81
  %v88 = vpack.c.b16 %v84, %v82
  %v109 = vunpack.c.l.b16 %v31
  %v110 = vunpack.c.l.b16 %v32
  %v111 = vunpack.c.l.b16 %v33
  %v112 = vunpack.c.l.b16 %v34
  %v113 = vunpack.c.l.b16 %v35
  %v114 = vunpack.c.l.b16 %v36
  %v115 = vunpack.c.l.b16 %v37
  %v116 = vunpack.c.l.b16 %v38
  %v117 = vunpack.c.l.b16 %v39
  %v118 = vunpack.c.l.b16 %v40
  %v119 = vunpack.c.l.b16 %v41
  %v120 = vunpack.c.l.b16 %v42
  %v121 = vunpack.c.l.b16 %v43
  %v122 = vunpack.c.l.b16 %v44
  %v123 = vunpack.c.l.b16 %v45
  %v124 = vunpack.c.l.b16 %v46
  %v125 = vunpack.c.l.b16 %v47
  %v126 = vunpack.c.l.b16 %v48
  %v127 = vpack.c.b16 %v110, %v109
  %v128 = vpack.c.b16 %v112, %v111
  %v129 = vpack.c.b16 %v114, %v113
  %v130 = vpack.c.b16 %v116, %v115
  %v131 = vpack.c.b16 %v118, %v117
  %v132 = vpack.c.b16 %v120, %v119
  %v133 = vpack.c.b16 %v122, %v121
  %v134 = vpack.c.b16 %v124, %v123
  %v135 = vpack.c.b16 %v126, %v125
  %vm145 = vcmask 130048
  %v147 = vsel %vm145, %v86, 0
  %v150 = vsel %vm145, %v88, 0
  %152 = vmatprep.subr.bf16.mxu0 0
  %153 = vmatpush1.bf16.msra.mxu0 %v127
  %154 = vmatprep.subr.bf16.mxu0 0
  %155 = vmatpush1.bf16.msra.mxu0 %v128
  %156 = vmatprep.subr.bf16.mxu0 0
  %157 = vmatpush1.bf16.msra.mxu0 %v129
  %158 = vmatprep.subr.bf16.mxu0 0
  %159 = vmatpush1.bf16.msra.mxu0 %v130
  %160 = vmatprep.subr.bf16.mxu0 0
  %161 = vmatpush1.bf16.msra.mxu0 %v131
  %162 = vmatprep.subr.bf16.mxu0 0
  %163 = vmatpush1.bf16.msra.mxu0 %v132
  %164 = vmatprep.subr.bf16.mxu0 0
  %165 = vmatpush1.bf16.msra.mxu0 %v133
  %166 = vmatprep.subr.bf16.mxu0 0
  %167 = vmatpush1.bf16.msra.mxu0 %v134
  %168 = vmatprep.subr.bf16.mxu0 0
  %169 = vmatpush1.bf16.msra.mxu0 %v135
  %170 = vmatprep.subr.bf16.mxu0 0
  %171 = vmatpush1.bf16.msra.mxu0 0
  %172 = vmatprep.subr.bf16.mxu0 0
  %173 = vmatpush1.bf16.msra.mxu0 0
  %174 = vmatprep.subr.bf16.mxu0 0
  %175 = vmatpush1.bf16.msra.mxu0 0
  %176 = vmatprep.subr.bf16.mxu0 0
  %177 = vmatpush1.bf16.msra.mxu0 0
  %178 = vmatprep.subr.bf16.mxu0 0
  %179 = vmatpush1.bf16.msra.mxu0 0
  %180 = vmatprep.subr.bf16.mxu0 0
  %181 = vmatpush1.bf16.msra.mxu0 0
  %182 = vmatprep.subr.bf16.mxu0 0
  %183 = vmatpush1.bf16.msra.mxu0 0
  %184 = vmatprep.mubr.bf16.mxu0 %v147
  %185 = vmatmul.mubr.bf16.gmra.mrb[0].mxu0 %v85
  %v186 = vpop.f32.mrb[0].mxu0
  %v187 = vadd.f32 %v56, %v186
  %v188 = vpop.f32.mrb[0].mxu0
  %v189 = vpop.f32.mrb[0].mxu0
  %v190 = vadd.f32 %v61, %v189
  %v191 = vpop.f32.mrb[0].mxu0
  %192 = vmatprep.mubr.bf16.mxu0 %v150
  %193 = vmatmul.mubr.bf16.gmra.mrb[0].mxu0 %v87
  %v194 = vpop.f32.mrb[0].mxu0
  %v195 = vadd.f32 %v66, %v194
  %v196 = vpop.f32.mrb[0].mxu0
  %v197 = vpop.f32.mrb[0].mxu0
  %v198 = vadd.f32 %v71, %v197
  %v199 = vpop.f32.mrb[0].mxu0
  %200 = vdwg.mxu0
  %v201 = vmax.f32 %v187, 0.0
  %v202 = vmax.f32 %v190, 0.0
  %v203 = vmax.f32 %v195, 0.0
  %v204 = vmax.f32 %v198, 0.0
  %v205 = vpack.c.bf16 %v202, %v201
  %v206 = vpack.c.bf16 %v204, %v203
  %v207 = vld [vmem:[%s1] sm:$0xf]
  %v208 = vld [vmem:[%s1 + $0x4] sm:$0xf]
  %v209 = vld [vmem:[%s1 + $0x8] sm:$0xf]
  %v210 = vld [vmem:[%s1 + $0xc] sm:$0xf]
  %s211 = scalar_lea.vmem %s1, 16
  %v212 = vld [vmem:[%s211] sm:$0xf]
  %v213 = vld [vmem:[%s211 + $0x4] sm:$0xf]
  %v214 = vld [vmem:[%s211 + $0x8] sm:$0xf]
  %v215 = vld [vmem:[%s211 + $0xc] sm:$0xf]
  %v216 = vmax.bf16 %v207, %v212
  %v217 = vmax.bf16 %v208, %v213
  %v218 = vmax.bf16 %v209, %v214
  %v219 = vmax.bf16 %v210, %v215
  %s220 = scalar_lea.vmem %s1, 32
  %v221 = vld [vmem:[%s220] sm:$0xf]
  %v222 = vld [vmem:[%s220 + $0x4] sm:$0xf]
  %v223 = vld [vmem:[%s220 + $0x8] sm:$0xf]
  %v224 = vld [vmem:[%s220 + $0xc] sm:$0xf]
  %s225 = scalar_lea.vmem %s1, 48
  %v226 = vld [vmem:[%s225] sm:$0xf]
  %v227 = vld [vmem:[%s225 + $0x4] sm:$0xf]
  %v228 = vld [vmem:[%s225 + $0x8] sm:$0xf]
  %v229 = vld [vmem:[%s225 + $0xc] sm:$0xf]
  %v230 = vmax.bf16 %v221, %v226
  %v231 = vmax.bf16 %v222, %v227
  %v232 = vmax.bf16 %v223, %v228
  %v233 = vmax.bf16 %v224, %v229
  %v234 = vmax.bf16 %v216, %v230
  %v235 = vmax.bf16 %v217, %v231
  %v236 = vmax.bf16 %v218, %v232
  %v237 = vmax.bf16 %v219, %v233
  %v238 = vld [vmem:[%s4] sm:$0xf]
  %v239 = vld [vmem:[%s4 + $0x4] sm:$0xf]
  %v240 = vld [vmem:[%s4 + $0x8] sm:$0xf]
  %v241 = vld [vmem:[%s4 + $0xc] sm:$0xf]
  %v242 = vld [vmem:[%s5] sm:$0xf]
  %v243 = vld [vmem:[%s5 + $0x4] sm:$0xf]
  %v244 = vld [vmem:[%s5 + $0x8] sm:$0xf]
  %v245 = vld [vmem:[%s5 + $0xc] sm:$0xf]
  %v250 = vunpack.c.l.b16 %v242
  %v251 = vunpack.c.l.b16 %v243
  %v252 = vunpack.c.l.b16 %v244
  %v253 = vunpack.c.l.b16 %v245
  %v254 = vpack.c.b16 %v251, %v250
  %v255 = vpack.c.b16 %v253, %v252
  %v260 = vunpack.c.l.b16 %v234
  %v261 = vunpack.c.l.b16 %v235
  %v262 = vunpack.c.l.b16 %v236
  %v263 = vunpack.c.l.b16 %v237
  %v264 = vpack.c.b16 %v261, %v260
  %v265 = vpack.c.b16 %v263, %v262
  %vm268 = vcmask 261120
  %v270 = vsel %vm268, %v254, 0
  %v273 = vsel %vm268, %v255, 0
  %275 = vmatprep.subr.bf16.mxu0 0
  %276 = vmatpush1.bf16.msra.mxu0 %v264
  %277 = vmatprep.subr.bf16.mxu0 0
  %278 = vmatpush1.bf16.msra.mxu0 %v265
  %279 = vmatprep.subr.bf16.mxu0 0
  %280 = vmatpush1.bf16.msra.mxu0 0
  %281 = vmatprep.subr.bf16.mxu0 0
  %282 = vmatpush1.bf16.msra.mxu0 0
  %283 = vmatprep.subr.bf16.mxu0 0
  %284 = vmatpush1.bf16.msra.mxu0 0
  %285 = vmatprep.subr.bf16.mxu0 0
  %286 = vmatpush1.bf16.msra.mxu0 0
  %287 = vmatprep.subr.bf16.mxu0 0
  %288 = vmatpush1.bf16.msra.mxu0 0
  %289 = vmatprep.subr.bf16.mxu0 0
  %290 = vmatpush1.bf16.msra.mxu0 0
  %291 = vmatprep.subr.bf16.mxu0 0
  %292 = vmatpush1.bf16.msra.mxu0 0
  %293 = vmatprep.subr.bf16.mxu0 0
  %294 = vmatpush1.bf16.msra.mxu0 0
  %295 = vmatprep.subr.bf16.mxu0 0
  %296 = vmatpush1.bf16.msra.mxu0 0
  %297 = vmatprep.subr.bf16.mxu0 0
  %298 = vmatpush1.bf16.msra.mxu0 0
  %299 = vmatprep.subr.bf16.mxu0 0
  %300 = vmatpush1.bf16.msra.mxu0 0
  %301 = vmatprep.subr.bf16.mxu0 0
  %302 = vmatpush1.bf16.msra.mxu0 0
  %303 = vmatprep.subr.bf16.mxu0 0
  %304 = vmatpush1.bf16.msra.mxu0 0
  %305 = vmatprep.subr.bf16.mxu0 0
  %306 = vmatpush1.bf16.msra.mxu0 0
  %307 = vmatprep.mubr.bf16.mxu0 0
  %308 = vmatmul.mubr.bf16.gmra.mrb[0].mxu0 %v270
  %v309 = vpop.f32.mrb[0].mxu0
  %v310 = vadd.f32 0.0, %v309
  %v311 = vpop.f32.mrb[0].mxu0
  %v312 = vpop.f32.mrb[0].mxu0
  %v313 = vadd.f32 0.0, %v312
  %v314 = vpop.f32.mrb[0].mxu0
  %315 = vmatprep.mubr.bf16.mxu0 0
  %316 = vmatmul.mubr.bf16.gmra.mrb[0].mxu0 %v273
  %v317 = vpop.f32.mrb[0].mxu0
  %v318 = vadd.f32 0.0, %v317
  %v319 = vpop.f32.mrb[0].mxu0
  %v320 = vpop.f32.mrb[0].mxu0
  %v321 = vadd.f32 0.0, %v320
  %v322 = vpop.f32.mrb[0].mxu0
  %323 = vdwg.mxu0
  %v328 = vunpack.c.l.b16 %v238
  %v329 = vunpack.c.l.b16 %v239
  %v330 = vunpack.c.l.b16 %v240
  %v331 = vunpack.c.l.b16 %v241
  %v332 = vpack.c.b16 %v329, %v328
  %v333 = vpack.c.b16 %v331, %v330
  %v335 = vsel %vm268, %v332, 0
  %v338 = vsel %vm268, %v333, 0
  %340 = vmatprep.subr.bf16.mxu0 0
  %341 = vmatpush1.bf16.msra.mxu0 %v205
  %342 = vmatprep.subr.bf16.mxu0 0
  %343 = vmatpush1.bf16.msra.mxu0 %v206
  %344 = vmatprep.subr.bf16.mxu0 0
  %345 = vmatpush1.bf16.msra.mxu0 0
  %346 = vmatprep.subr.bf16.mxu0 0
  %347 = vmatpush1.bf16.msra.mxu0 0
  %348 = vmatprep.subr.bf16.mxu0 0
  %349 = vmatpush1.bf16.msra.mxu0 0
  %350 = vmatprep.subr.bf16.mxu0 0
  %351 = vmatpush1.bf16.msra.mxu0 0
  %352 = vmatprep.subr.bf16.mxu0 0
  %353 = vmatpush1.bf16.msra.mxu0 0
  %354 = vmatprep.subr.bf16.mxu0 0
  %355 = vmatpush1.bf16.msra.mxu0 0
  %356 = vmatprep.subr.bf16.mxu0 0
  %357 = vmatpush1.bf16.msra.mxu0 0
  %358 = vmatprep.subr.bf16.mxu0 0
  %359 = vmatpush1.bf16.msra.mxu0 0
  %360 = vmatprep.subr.bf16.mxu0 0
  %361 = vmatpush1.bf16.msra.mxu0 0
  %362 = vmatprep.subr.bf16.mxu0 0
  %363 = vmatpush1.bf16.msra.mxu0 0
  %364 = vmatprep.subr.bf16.mxu0 0
  %365 = vmatpush1.bf16.msra.mxu0 0
  %366 = vmatprep.subr.bf16.mxu0 0
  %367 = vmatpush1.bf16.msra.mxu0 0
  %368 = vmatprep.subr.bf16.mxu0 0
  %369 = vmatpush1.bf16.msra.mxu0 0
  %370 = vmatprep.subr.bf16.mxu0 0
  %371 = vmatpush1.bf16.msra.mxu0 0
  %372 = vmatprep.mubr.bf16.mxu0 0
  %373 = vmatmul.mubr.bf16.gmra.mrb[0].mxu0 %v335
  %v374 = vpop.f32.mrb[0].mxu0
  %v375 = vadd.f32 %v310, %v374
  %v376 = vpop.f32.mrb[0].mxu0
  %v377 = vpop.f32.mrb[0].mxu0
  %v378 = vadd.f32 %v313, %v377
  %v379 = vpop.f32.mrb[0].mxu0
  %380 = vmatprep.mubr.bf16.mxu0 0
  %381 = vmatmul.mubr.bf16.gmra.mrb[0].mxu0 %v338
  %v382 = vpop.f32.mrb[0].mxu0
  %v383 = vadd.f32 %v318, %v382
  %v384 = vpop.f32.mrb[0].mxu0
  %v385 = vpop.f32.mrb[0].mxu0
  %v386 = vadd.f32 %v321, %v385
  %v387 = vpop.f32.mrb[0].mxu0
  %388 = vdwg.mxu0
  %v389 = vld [vmem:[%s6] sm:$0xff]
  %v390 = vld [vmem:[%s6 + $0x8] sm:$0xff]
  %v391 = vld [vmem:[%s6 + $0x10] sm:$0xff]
  %v392 = vld [vmem:[%s6 + $0x18] sm:$0xff]
  %394 = vset.pattern.permute.xlu0 0
  %395 = vperm.xlu0 %394, %v389
  %v396 = vpop.permute.xlu0 %395
  %399 = vset.pattern.permute.xlu0 0
  %400 = vperm.xlu0 %399, %v390
  %v401 = vpop.permute.xlu0 %400
  %404 = vset.pattern.permute.xlu0 0
  %405 = vperm.xlu0 %404, %v391
  %v406 = vpop.permute.xlu0 %405
  %409 = vset.pattern.permute.xlu0 0
  %410 = vperm.xlu0 %409, %v392
  %v411 = vpop.permute.xlu0 %410
  %v413 = vadd.f32 %v375, %v396
  %v414 = vadd.f32 %v378, %v401
  %v415 = vadd.f32 %v383, %v406
  %v416 = vadd.f32 %v386, %v411
  %v417 = vmax.f32 %v413, 0.0
  %v418 = vmax.f32 %v414, 0.0
  %v419 = vmax.f32 %v415, 0.0
  %v420 = vmax.f32 %v416, 0.0
  %421 = vst [vmem:[%s7] sm:$0xff] %v417
  %422 = vst [vmem:[%s7 + $0x8] sm:$0xff] %v418
  %423 = vst [vmem:[%s7 + $0x10] sm:$0xff] %v419
  %424 = vst [vmem:[%s7 + $0x18] sm:$0xff] %v420
  // Predicated region
  $region30: #{stem_block.3} parent=0 // pred_check
    _
  $region31: #{stem_block.3} parent=0 // pred_check_branch
    %426 = sbr.rel (0) target = $region33
  $region32: #{stem_block.3} parent=0 // pred_region
    _
  $region33: #{stem_block.3} parent=0 // pred_fallthru
    _
  // Predicated region
  $region34: #{stem_block.3} parent=0 // pred_check
    _
  $region35: #{stem_block.3} parent=0 // pred_check_branch
    %428 = sbr.rel (0) target = $region37
  $region36: #{stem_block.3} parent=0 // pred_region
    _
  $region37: #{stem_block.3} parent=0 // pred_fallthru
    _

</llo_original>
